<compile_context>
chip_gen: v7x
topology: tpu7x:2x2x1
jax: 0.10.0
libtpu: 0.0.40
codegen_flags: <defaults>
</compile_context>

<pallas_src>
import jax
import jax.numpy as jnp
import numpy as np
from jax import lax
from jax.experimental import pallas as pl
from jax.experimental.pallas import tpu as pltpu


def upsample1d_kernel(x_ref, prev_ref, next_ref, w_cur_ref, w_pn_ref, b_ref, out_ref):
    """One (batch, L-tile) block.

    x_ref    : (1, TL, Cin)      compute dtype (bf16 by default)
    prev_ref : (1, 1, 1, Cin)    x[t*TL - 1]   (zeros for the first tile)
    next_ref : (1, 1, 1, Cin)    x[(t+1)*TL]   (zeros for the last tile)
    w_cur_ref: (Cin, 2*Cout)     [W1+W2 | W0+W1]  center taps, even|odd lanes
    w_pn_ref : (2, Cin, Cout)    [W_prev (even tap on x[l-1]), W_next (odd tap on x[l+1])]
    b_ref    : (1, 2*Cout) f32   bias duplicated for both phases
    out_ref  : (1, TL, 2*Cout)   even phase lanes [0:Cout], odd phase lanes [Cout:2Cout]
    """
    x = x_ref[0]                                           # (TL, Cin), bf16 -> MXU
    tl = x.shape[0]
    cout = w_pn_ref.shape[2]

    # Center tap for both output phases in one lane-dense matmul, f32 accumulation.
    acc = jnp.dot(x, w_cur_ref[...], preferred_element_type=jnp.float32)      # (TL, 2*Cout)

    # Neighbor taps: matmul first, then shift the (TL, Cout) *outputs* by one row (XLU).
    p = jnp.dot(x, w_pn_ref[0], preferred_element_type=jnp.float32)           # even, x[l-1]
    q = jnp.dot(x, w_pn_ref[1], preferred_element_type=jnp.float32)           # odd,  x[l+1]
    p_halo = jnp.dot(prev_ref[0, 0], w_pn_ref[0], preferred_element_type=jnp.float32)  # (1, Cout)
    q_halo = jnp.dot(next_ref[0, 0], w_pn_ref[1], preferred_element_type=jnp.float32)  # (1, Cout)

    row = lax.broadcasted_iota(jnp.int32, (tl, cout), 0)
    # p_sh[l] = dot(x[l-1], W_prev); row 0 comes from the halo row of the previous tile.
    p_sh = jnp.where(row == 0, p_halo, pltpu.roll(p, shift=1, axis=0))
    # q_sh[l] = dot(x[l+1], W_next); last row comes from the halo row of the next tile.
    q_sh = jnp.where(row == tl - 1, q_halo, pltpu.roll(q, shift=tl - 1, axis=0))

    out = acc + jnp.concatenate([p_sh, q_sh], axis=1) + b_ref[...]
    out_ref[0] = out.astype(out_ref.dtype)


def _pick_l_tile(length, cin, cout2, x_bytes=2, out_bytes=4, budget_bytes=6 * 1024 * 1024):
    """Largest multiple-of-8 divisor of `length` whose double-buffered x/out tiles fit."""
    per_row = 2 * (cin * x_bytes + cout2 * out_bytes)      # double-buffered in + out rows
    cap = max(8, budget_bytes // max(per_row, 1))
    best = None
    t = 8
    while t <= min(length, cap):
        if length % t == 0:
            best = t
        t += 8
    # Fall back to a single full-length tile (allowed: block dim == full array dim).
    return best if best is not None else length


def _run_kernel(x_nlc, prev_rows, next_rows, w_cur, w_pn, b2, out_dtype, l_tile):
    n, length, cin = x_nlc.shape
    cout2 = w_cur.shape[1]
    nt = length // l_tile
    return pl.pallas_call(
        upsample1d_kernel,
        out_shape=jax.ShapeDtypeStruct((n, length, cout2), out_dtype),
        grid=(n, nt),
        in_specs=[
            pl.BlockSpec((1, l_tile, cin), lambda i, t: (i, t, 0)),
            pl.BlockSpec((1, 1, 1, cin), lambda i, t: (i, t, 0, 0)),
            pl.BlockSpec((1, 1, 1, cin), lambda i, t: (i, t, 0, 0)),
            pl.BlockSpec((cin, cout2), lambda i, t: (0, 0)),
            pl.BlockSpec((2, cin, cout2 // 2), lambda i, t: (0, 0, 0)),
            pl.BlockSpec((1, cout2), lambda i, t: (0, 0)),
        ],
        out_specs=pl.BlockSpec((1, l_tile, cout2), lambda i, t: (i, t, 0)),
        compiler_params=pltpu.CompilerParams(
            dimension_semantics=("parallel", "parallel"),
            vmem_limit_bytes=32 * 1024 * 1024,
        ),
    )(x_nlc, prev_rows, next_rows, w_cur, w_pn, b2)


def _effective_weights(channels, out_channels, use_conv, use_conv_transpose,
                       conv_weight, conv_bias, compute_dtype):
    """Build the fused tap weights in (Cin, Cout) orientation."""
    if use_conv_transpose:
        # torch ConvTranspose1d weight: (Cin, Cout, 4).
        # out[2l] = W1@x[l] + W3@x[l-1];  out[2l+1] = W2@x[l] + W0@x[l+1].
        w = conv_weight.astype(jnp.float32)
        a_prev, a_ce, a_co, a_next = w[:, :, 3], w[:, :, 1], w[:, :, 2], w[:, :, 0]
    elif use_conv:
        # torch Conv1d weight: (Cout, Cin, 3) -> taps transposed to (Cin, Cout).
        w = conv_weight.astype(jnp.float32)
        w0, w1, w2 = w[:, :, 0].T, w[:, :, 1].T, w[:, :, 2].T
        a_prev, a_ce, a_co, a_next = w0, w1 + w2, w0 + w1, w2
    else:
        eye = jnp.eye(channels, dtype=jnp.float32)
        zero = jnp.zeros_like(eye)
        a_prev, a_ce, a_co, a_next = zero, eye, eye, zero

    if conv_bias is None or not (use_conv or use_conv_transpose):
        b = jnp.zeros((out_channels,), jnp.float32)
    else:
        b = conv_bias.astype(jnp.float32)

    w_cur = jnp.concatenate([a_ce, a_co], axis=1).astype(compute_dtype)   # (Cin, 2*Cout)
    w_pn = jnp.stack([a_prev, a_next], axis=0).astype(compute_dtype)      # (2, Cin, Cout)
    b2 = jnp.concatenate([b, b], axis=0).reshape(1, 2 * out_channels)     # (1, 2*Cout) f32
    return w_cur, w_pn, b2


def upsample1d_forward_nlc(x_nlc, *, channels, use_conv=False, use_conv_transpose=False,
                           out_channels=None, conv_weight=None, conv_bias=None,
                           compute_dtype=jnp.bfloat16, l_tile=None):
    """Channels-last forward: x (N, L, Cin) -> (N, 2L, Cout).  No layout transposes."""
    n, length, cin = x_nlc.shape
    assert cin == channels
    if not (use_conv or use_conv_transpose):
        out_channels = channels
    out_channels = out_channels or channels
    out_dtype = x_nlc.dtype

    w_cur, w_pn, b2 = _effective_weights(channels, out_channels, use_conv,
                                         use_conv_transpose, conv_weight, conv_bias,
                                         compute_dtype)

    xc = x_nlc.astype(compute_dtype)
    if l_tile is None:
        l_tile = _pick_l_tile(length, cin, 2 * out_channels,
                              x_bytes=jnp.dtype(compute_dtype).itemsize,
                              out_bytes=jnp.dtype(out_dtype).itemsize)
    assert length % l_tile == 0, (length, l_tile)
    nt = length // l_tile

    # One halo row per tile boundary; zeros at the true sequence ends so the kernel
    # needs no boundary masking.  (N, nt, 1, Cin): the trailing (1, Cin) keeps the
    # block's last-two dims equal to the full array dims.
    zrow = jnp.zeros((n, 1, cin), compute_dtype)
    prev_rows = jnp.concatenate([zrow, xc[:, l_tile - 1:length - 1:l_tile, :]], axis=1)
    next_rows = jnp.concatenate([xc[:, l_tile:length:l_tile, :], zrow], axis=1)
    prev_rows = prev_rows.reshape(n, nt, 1, cin)
    next_rows = next_rows.reshape(n, nt, 1, cin)

    out = _run_kernel(xc, prev_rows, next_rows, w_cur, w_pn, b2, out_dtype, l_tile)
    # (N, L, 2*Cout) -> (N, 2L, Cout): even/odd phases are already interleaved in lanes,
    # so this is a free reshape (no transpose / extra HBM pass).
    return out.reshape(n, 2 * length, out_channels)


def upsample1d_forward(x, *, channels, use_conv=False, use_conv_transpose=False,
                       out_channels=None, conv_weight=None, conv_bias=None,
                       compute_dtype=jnp.bfloat16, l_tile=None):
    """PyTorch-layout forward: x (N, C, L) -> (N, Cout, 2L).

    If the surrounding model is channels-last, call upsample1d_forward_nlc directly
    and skip the two HBM transpose passes done here.
    """
    assert x.shape[1] == channels
    # TODO(synk): arbitrary `output_size` for F.interpolate is not supported; only scale_factor=2.0.
    x_nlc = jnp.transpose(x, (0, 2, 1))
    out = upsample1d_forward_nlc(
        x_nlc, channels=channels, use_conv=use_conv,
        use_conv_transpose=use_conv_transpose, out_channels=out_channels,
        conv_weight=conv_weight, conv_bias=conv_bias,
        compute_dtype=compute_dtype, l_tile=l_tile)
    return jnp.transpose(out, (0, 2, 1))


def _reference(x, *, use_conv, use_conv_transpose, w=None, b=None):
    """Pure-JAX reference matching the PyTorch module semantics."""
    if use_conv_transpose:
        rhs = jnp.transpose(w[:, :, ::-1], (1, 0, 2))      # (Cout, Cin, 4), flipped taps
        y = lax.conv_general_dilated(x, rhs, window_strides=(1,), padding=((2, 2),),
                                     lhs_dilation=(2,),
                                     dimension_numbers=("NCH", "OIH", "NCH"))
        return y + b[None, :, None]
    xu = jnp.repeat(x, 2, axis=-1)                         # F.interpolate nearest, scale 2
    if use_conv:
        y = lax.conv_general_dilated(xu, w, window_strides=(1,), padding=((1, 1),),
                                     dimension_numbers=("NCH", "OIH", "NCH"))
        return y + b[None, :, None]
    return xu


if __name__ == "__main__":
    key = jax.random.PRNGKey(0)
    kx, kx2, kw1, kb1, kw2, kb2 = jax.random.split(key, 6)

    N, C, L = 2, 8, 16
    Cout = 8
    x = jax.random.normal(kx, (N, C, L), dtype=jnp.float32)

    # Conv1d(C, Cout, 3, padding=1) params
    w_conv = 0.1 * jax.random.normal(kw1, (Cout, C, 3), dtype=jnp.float32)
    b_conv = 0.1 * jax.random.normal(kb1, (Cout,), dtype=jnp.float32)
    # ConvTranspose1d(C, Cout, 4, 2, 1) params
    w_ct = 0.1 * jax.random.normal(kw2, (C, Cout, 4), dtype=jnp.float32)
    b_ct = 0.1 * jax.random.normal(kb2, (Cout,), dtype=jnp.float32)

    # 1) use_conv=True (nearest 2x upsample + Conv1d), bf16 compute on the MXU.
    y1 = upsample1d_forward(x, channels=C, use_conv=True, out_channels=Cout,
                            conv_weight=w_conv, conv_bias=b_conv)
    jax.block_until_ready(y1)
    r1 = _reference(x, use_conv=True, use_conv_transpose=False, w=w_conv, b=b_conv)
    assert y1.shape == (N, Cout, 2 * L)
    np.testing.assert_allclose(np.asarray(y1), np.asarray(r1), rtol=2e-2, atol=2e-2)

    # 2) use_conv=False (pure nearest 2x upsample), f32 compute path.
    y2 = upsample1d_forward(x, channels=C, use_conv=False, compute_dtype=jnp.float32)
    jax.block_until_ready(y2)
    r2 = _reference(x, use_conv=False, use_conv_transpose=False)
    assert y2.shape == (N, C, 2 * L)
    np.testing.assert_allclose(np.asarray(y2), np.asarray(r2), rtol=5e-3, atol=5e-3)

    # 3) use_conv_transpose=True (ConvTranspose1d(4, 2, 1)), bf16 compute.
    y3 = upsample1d_forward(x, channels=C, use_conv_transpose=True, out_channels=Cout,
                            conv_weight=w_ct, conv_bias=b_ct)
    jax.block_until_ready(y3)
    r3 = _reference(x, use_conv=False, use_conv_transpose=True, w=w_ct, b=b_ct)
    assert y3.shape == (N, Cout, 2 * L)
    np.testing.assert_allclose(np.asarray(y3), np.asarray(r3), rtol=2e-2, atol=2e-2)

    # 4) multi-tile L axis (exercises the per-tile halo / roll path): L=32, l_tile=8.
    x_long = jax.random.normal(kx2, (N, C, 32), dtype=jnp.float32)
    y4 = upsample1d_forward(x_long, channels=C, use_conv=True, out_channels=Cout,
                            conv_weight=w_conv, conv_bias=b_conv, l_tile=8)
    jax.block_until_ready(y4)
    r4 = _reference(x_long, use_conv=True, use_conv_transpose=False, w=w_conv, b=b_conv)
    assert y4.shape == (N, Cout, 64)
    np.testing.assert_allclose(np.asarray(y4), np.asarray(r4), rtol=2e-2, atol=2e-2)

    print("KERNEL_OK")
</pallas_src>

<mosaic_0001>
module attributes {stable_mosaic.version = 11 : i64} {
  func.func @upsample1d_kernel(%arg0: i32, %arg1: i32, %arg2: memref<1x16x8xbf16, #tpu.memory_space<vmem>>, %arg3: memref<1x1x1x8xbf16, #tpu.memory_space<vmem>>, %arg4: memref<1x1x1x8xbf16, #tpu.memory_space<vmem>>, %arg5: memref<8x16xbf16, #tpu.memory_space<vmem>>, %arg6: memref<2x8x8xbf16, #tpu.memory_space<vmem>>, %arg7: memref<1x16xf32, #tpu.memory_space<vmem>>, %arg8: memref<1x16x16xf32, #tpu.memory_space<vmem>>) attributes {dimension_semantics = [#tpu.dimension_semantics<parallel>, #tpu.dimension_semantics<parallel>], iteration_bounds = array<i64: 2, 1>, scalar_prefetch = 0 : i64, scratch_operands = 0 : i64, tpu.core_type = #tpu.core_type<tc>, window_params = [{transform_indices = @transform_0, window_bounds = array<i64: 1, 16, 8>}, {transform_indices = @transform_1, window_bounds = array<i64: 1, 1, 1, 8>}, {transform_indices = @transform_2, window_bounds = array<i64: 1, 1, 1, 8>}, {pipeline_mode = #tpu.pipeline_mode<synchronous>, transform_indices = @transform_3, window_bounds = array<i64: 8, 16>}, {pipeline_mode = #tpu.pipeline_mode<synchronous>, transform_indices = @transform_4, window_bounds = array<i64: 2, 8, 8>}, {pipeline_mode = #tpu.pipeline_mode<synchronous>, transform_indices = @transform_5, window_bounds = array<i64: 1, 16>}, {transform_indices = @transform_6, window_bounds = array<i64: 1, 16, 16>}]} {
    %c0 = arith.constant 0 : index
    %c0_0 = arith.constant 0 : index
    %c0_1 = arith.constant 0 : index
    %0 = vector.load %arg2[%c0, %c0_0, %c0_1] : memref<1x16x8xbf16, #tpu.memory_space<vmem>>, vector<1x16x8xbf16>
    %1 = vector.shape_cast %0 : vector<1x16x8xbf16> to vector<16x8xbf16>
    %c0_2 = arith.constant 0 : index
    %c0_3 = arith.constant 0 : index
    %2 = vector.load %arg5[%c0_2, %c0_3] : memref<8x16xbf16, #tpu.memory_space<vmem>>, vector<8x16xbf16>
    %cst = arith.constant dense<0.000000e+00> : vector<16x16xf32>
    %3 = tpu.matmul %1, %2, %cst {dimension_numbers = #tpu.dot_dimension_numbers<[1], [0], [0], [1], [0, 0, 1, 1], [], []>} : vector<16x8xbf16>, vector<8x16xbf16>, vector<16x16xf32> -> vector<16x16xf32>
    %c0_4 = arith.constant 0 : index
    %c0_5 = arith.constant 0 : index
    %c0_6 = arith.constant 0 : index
    %4 = vector.load %arg6[%c0_4, %c0_5, %c0_6] : memref<2x8x8xbf16, #tpu.memory_space<vmem>>, vector<1x8x8xbf16>
    %5 = vector.shape_cast %4 : vector<1x8x8xbf16> to vector<8x8xbf16>
    %cst_7 = arith.constant dense<0.000000e+00> : vector<16x8xf32>
    %6 = tpu.matmul %1, %5, %cst_7 {dimension_numbers = #tpu.dot_dimension_numbers<[1], [0], [0], [1], [0, 0, 1, 1], [], []>} : vector<16x8xbf16>, vector<8x8xbf16>, vector<16x8xf32> -> vector<16x8xf32>
    %c1 = arith.constant 1 : index
    %c0_8 = arith.constant 0 : index
    %c0_9 = arith.constant 0 : index
    %7 = vector.load %arg6[%c1, %c0_8, %c0_9] : memref<2x8x8xbf16, #tpu.memory_space<vmem>>, vector<1x8x8xbf16>
    %8 = vector.shape_cast %7 : vector<1x8x8xbf16> to vector<8x8xbf16>
    %cst_10 = arith.constant dense<0.000000e+00> : vector<16x8xf32>
    %9 = tpu.matmul %1, %8, %cst_10 {dimension_numbers = #tpu.dot_dimension_numbers<[1], [0], [0], [1], [0, 0, 1, 1], [], []>} : vector<16x8xbf16>, vector<8x8xbf16>, vector<16x8xf32> -> vector<16x8xf32>
    %c0_11 = arith.constant 0 : index
    %c0_12 = arith.constant 0 : index
    %c0_13 = arith.constant 0 : index
    %c0_14 = arith.constant 0 : index
    %10 = vector.load %arg3[%c0_11, %c0_12, %c0_13, %c0_14] : memref<1x1x1x8xbf16, #tpu.memory_space<vmem>>, vector<1x1x1x8xbf16>
    %11 = vector.shape_cast %10 : vector<1x1x1x8xbf16> to vector<1x8xbf16>
    %c0_15 = arith.constant 0 : index
    %c0_16 = arith.constant 0 : index
    %c0_17 = arith.constant 0 : index
    %12 = vector.load %arg6[%c0_15, %c0_16, %c0_17] : memref<2x8x8xbf16, #tpu.memory_space<vmem>>, vector<1x8x8xbf16>
    %13 = vector.shape_cast %12 : vector<1x8x8xbf16> to vector<8x8xbf16>
    %cst_18 = arith.constant dense<0.000000e+00> : vector<1x8xf32>
    %14 = tpu.matmul %11, %13, %cst_18 {dimension_numbers = #tpu.dot_dimension_numbers<[1], [0], [0], [1], [0, 0, 1, 1], [], []>} : vector<1x8xbf16>, vector<8x8xbf16>, vector<1x8xf32> -> vector<1x8xf32>
    %c0_19 = arith.constant 0 : index
    %c0_20 = arith.constant 0 : index
    %c0_21 = arith.constant 0 : index
    %c0_22 = arith.constant 0 : index
    %15 = vector.load %arg4[%c0_19, %c0_20, %c0_21, %c0_22] : memref<1x1x1x8xbf16, #tpu.memory_space<vmem>>, vector<1x1x1x8xbf16>
    %16 = vector.shape_cast %15 : vector<1x1x1x8xbf16> to vector<1x8xbf16>
    %c1_23 = arith.constant 1 : index
    %c0_24 = arith.constant 0 : index
    %c0_25 = arith.constant 0 : index
    %17 = vector.load %arg6[%c1_23, %c0_24, %c0_25] : memref<2x8x8xbf16, #tpu.memory_space<vmem>>, vector<1x8x8xbf16>
    %18 = vector.shape_cast %17 : vector<1x8x8xbf16> to vector<8x8xbf16>
    %cst_26 = arith.constant dense<0.000000e+00> : vector<1x8xf32>
    %19 = tpu.matmul %16, %18, %cst_26 {dimension_numbers = #tpu.dot_dimension_numbers<[1], [0], [0], [1], [0, 0, 1, 1], [], []>} : vector<1x8xbf16>, vector<8x8xbf16>, vector<1x8xf32> -> vector<1x8xf32>
    %20 = tpu.iota {dimensions = array<i32: 0>} : vector<16x8xi32>
    %c0_i32 = arith.constant 0 : i32
    %21 = vector.broadcast %c0_i32 : i32 to vector<16x8xi32>
    %22 = arith.cmpi eq, %20, %21 : vector<16x8xi32>
    %c1_i32 = arith.constant 1 : i32
    %23 = tpu.dynamic_rotate %6 by %c1_i32 dim 0 : vector<16x8xf32>, i32 -> vector<16x8xf32>
    %24 = vector.shape_cast %14 : vector<1x8xf32> to vector<1x8xf32>
    %25 = vector.broadcast %24 : vector<1x8xf32> to vector<16x8xf32>
    %26 = arith.select %22, %25, %23 : vector<16x8xi1>, vector<16x8xf32>
    %c15_i32 = arith.constant 15 : i32
    %27 = vector.broadcast %c15_i32 : i32 to vector<16x8xi32>
    %28 = arith.cmpi eq, %20, %27 : vector<16x8xi32>
    %c15_i32_27 = arith.constant 15 : i32
    %29 = tpu.dynamic_rotate %9 by %c15_i32_27 dim 0 : vector<16x8xf32>, i32 -> vector<16x8xf32>
    %30 = vector.shape_cast %19 : vector<1x8xf32> to vector<1x8xf32>
    %31 = vector.broadcast %30 : vector<1x8xf32> to vector<16x8xf32>
    %32 = arith.select %28, %31, %29 : vector<16x8xi1>, vector<16x8xf32>
    %33 = tpu.concatenate %26, %32 in 1 : vector<16x8xf32>, vector<16x8xf32> -> vector<16x16xf32>
    %34 = arith.addf %3, %33 : vector<16x16xf32>
    %c0_28 = arith.constant 0 : index
    %c0_29 = arith.constant 0 : index
    %35 = vector.load %arg7[%c0_28, %c0_29] : memref<1x16xf32, #tpu.memory_space<vmem>>, vector<1x16xf32>
    %36 = vector.broadcast %35 : vector<1x16xf32> to vector<16x16xf32>
    %37 = arith.addf %34, %36 : vector<16x16xf32>
    %c0_30 = arith.constant 0 : index
    %c0_31 = arith.constant 0 : index
    %c0_32 = arith.constant 0 : index
    %38 = vector.load %arg8[%c0_30, %c0_31, %c0_32] : memref<1x16x16xf32, #tpu.memory_space<vmem>>, vector<1x16x16xf32>
    %39 = vector.shape_cast %38 : vector<1x16x16xf32> to vector<16x16xf32>
    %40 = vector.shape_cast %37 : vector<16x16xf32> to vector<1x16x16xf32>
    tpu.vector_store %arg8[%c0_30, %c0_31, %c0_32], %40 {strides = array<i32>} : memref<1x16x16xf32, #tpu.memory_space<vmem>>, vector<1x16x16xf32>,
    return
  }
  func.func @transform_0(%arg0: i32, %arg1: i32) -> (i32, i32, i32) {
    %c0_i32 = arith.constant 0 : i32
    %c0_i32_0 = arith.constant 0 : i32
    return %arg0, %arg1, %c0_i32 : i32, i32, i32
  }
  func.func @transform_1(%arg0: i32, %arg1: i32) -> (i32, i32, i32, i32) {
    %c0_i32 = arith.constant 0 : i32
    %c0_i32_0 = arith.constant 0 : i32
    %c0_i32_1 = arith.constant 0 : i32
    return %arg0, %arg1, %c0_i32, %c0_i32_0 : i32, i32, i32, i32
  }
  func.func @transform_2(%arg0: i32, %arg1: i32) -> (i32, i32, i32, i32) {
    %c0_i32 = arith.constant 0 : i32
    %c0_i32_0 = arith.constant 0 : i32
    %c0_i32_1 = arith.constant 0 : i32
    return %arg0, %arg1, %c0_i32, %c0_i32_0 : i32, i32, i32, i32
  }
  func.func @transform_3(%arg0: i32, %arg1: i32) -> (i32, i32) {
    %c0_i32 = arith.constant 0 : i32
    %c0_i32_0 = arith.constant 0 : i32
    %c0_i32_1 = arith.constant 0 : i32
    return %c0_i32, %c0_i32_0 : i32, i32
  }
  func.func @transform_4(%arg0: i32, %arg1: i32) -> (i32, i32, i32) {
    %c0_i32 = arith.constant 0 : i32
    %c0_i32_0 = arith.constant 0 : i32
    %c0_i32_1 = arith.constant 0 : i32
    %c0_i32_2 = arith.constant 0 : i32
    return %c0_i32, %c0_i32_0, %c0_i32_1 : i32, i32, i32
  }
  func.func @transform_5(%arg0: i32, %arg1: i32) -> (i32, i32) {
    %c0_i32 = arith.constant 0 : i32
    %c0_i32_0 = arith.constant 0 : i32
    %c0_i32_1 = arith.constant 0 : i32
    return %c0_i32, %c0_i32_0 : i32, i32
  }
  func.func @transform_6(%arg0: i32, %arg1: i32) -> (i32, i32, i32) {
    %c0_i32 = arith.constant 0 : i32
    %c0_i32_0 = arith.constant 0 : i32
    return %arg0, %arg1, %c0_i32 : i32, i32, i32
  }
}

</mosaic_0001>

<llo_original>
// kernel: tpu_custom_call.1
$region0: #{tpu_custom_call.1}
  #allocation0 [shape = 'u32[]', space=smem, size = 0x4, offset = 0x4, fixed_abs, tag = 'smem constant byte address 0x4 - core index']
  #allocation1 [shape = 'u32[144,128]{1,0:T(1,128)}', space=vmem, size = 0x12000, scoped, tag = 'internal scratch']
  %s0 = inlined_call_operand.vmem [shape: bf16[2,16,8], index: 0, kind: input, shape index: {}]
  %s1 = inlined_call_operand.vmem [shape: bf16[2,1,1,8], index: 1, kind: input, shape index: {}]
  %s2 = inlined_call_operand.vmem [shape: bf16[2,1,1,8], index: 2, kind: input, shape index: {}]
  %s3 = inlined_call_operand.vmem [shape: bf16[8,16], index: 3, kind: input, shape index: {}]
  %s4 = inlined_call_operand.vmem [shape: bf16[2,8,8], index: 4, kind: input, shape index: {}]
  %s5 = inlined_call_operand.vmem [shape: f32[1,16], index: 5, kind: input, shape index: {}]
  %s6 = inlined_call_operand.hbm [shape: f32[2,16,16], index: 6, kind: output, shape index: {}]
  %s7 = sld [smem:[#allocation0]]
  $region57: #{tpu_custom_call.1} parent=0
    _
  %s9 = ssub.s32 1, %s7
  %s10 = scalar_select 0, %s9, %s7
  $region1: #{tpu_custom_call.1} parent=0
    #allocation2 [shape = 'u8[16384]{0}', space=vmem, size = 0x4000, scoped, tag = 'output window, operand 0']
    #allocation3 [shape = 's32[2]{0}', space=sflag, size = 0x8, scoped, tag = 'scoped memory for tpu_custom_call.1']
    %11 = vsyncpa [#allocation3], 0
    %s12 = scalar_lea.sflag [#allocation3], 1
    %13 = vsyncpa %s12, 0
    loop: start=0, step=1, limit=4
    $region2: #{tpu_custom_call.1} parent=1 // loop_pre_header
      _
    $region3: #{tpu_custom_call.1} parent=1 // loop_header
      %s15 = sphi 0, %s19
      %p16 = scmp.ge.s32.totalorder %s15, 4
      %s22 = sphi 0, %s34
      %s23 = sphi 0, %s30
      %s24 = sphi 0, %s22
      %s25 = sphi 0, %s23
      %s26 = sphi 0, %s24
      %s27 = sphi 0, %s25
      %s39 = sphi 0, %s41
      %s42 = sphi 0, %s39
      %s43 = sphi 0, %s42
      %s59 = sphi 0, %s43
      %s67 = sphi 0, %s69
      %s70 = sphi 0, %s67
      %s71 = sphi 0, %s70
      %s87 = sphi 0, %s71
      %s95 = sphi 0, %s97
      %s98 = sphi 0, %s95
      %s99 = sphi 0, %s98
      %s115 = sphi 0, %s99
      %s119 = sphi 0, %s119
      %s121 = sphi 0, %s119
      %s122 = sphi 0, %s121
      %s136 = sphi 0, %s122
      %s140 = sphi 0, %s140
      %s142 = sphi 0, %s140
      %s143 = sphi 0, %s142
      %s157 = sphi 0, %s143
      %s161 = sphi 0, %s161
      %s163 = sphi 0, %s161
      %s164 = sphi 0, %s163
      %s178 = sphi 0, %s164
      %s186 = sphi 0, %s188
      %s189 = sphi 0, %s186
      %s190 = sphi 0, %s189
      %s206 = sphi 0, %s190
    $region4: #{tpu_custom_call.1} parent=1 // loop_header_branch
      %18 = sbr.rel (%p16) target = $region8
    $region5: #{tpu_custom_call.1} parent=1 // loop_body
      %s20 = ssub.s32 %s15, 1
      %s21 = ssub.s32 %s15, 2
      %s28 = sadd.s32 1, %s23
      %p29 = scmp.ge.s32.totalorder %s28, 1
      %s30 = scalar_select %p29, 0, %s28
      %s31 = sadd.s32 1, %s22
      %s32 = scalar_select %p29, %s31, %s22
      %p33 = scmp.ge.s32.totalorder %s32, 2
      %s34 = scalar_select %p33, 0, %s32
      %s35 = ssub.s32 %s22, %s34
      %s36 = ssub.s32 %s23, %s30
      %s37 = sor.u32 %s35, %s36
      %p38 = scmp.eq.s32.totalorder %s37, 0
      %s40 = sadd.s32 %s39, 1
      %s41 = scalar_select %p38, %s39, %s40
      %p44 = pneg %p38
      %p45 = scmp.eq.s32.totalorder %s15, 1
      %p46 = por %p44, %p45
      %p47 = scmp.ne.s32.totalorder %s39, %s42
      %p48 = scmp.eq.s32.totalorder %s15, 0
      %p49 = por %p47, %p48
      %p50 = scmp.ne.s32.totalorder %s39, %s42
      %p51 = scmp.eq.s32.totalorder %s20, 1
      %p52 = por %p50, %p51
      %p53 = scmp.ne.s32.totalorder %s42, %s43
      %p54 = scmp.eq.s32.totalorder %s20, 0
      %p55 = por %p53, %p54
      %p56 = scmp.ne.s32.totalorder %s42, %s43
      %p57 = scmp.eq.s32.totalorder %s21, 1
      %p58 = por %p56, %p57
      %p60 = scmp.ne.s32.totalorder %s43, %s59
      %p61 = scmp.eq.s32.totalorder %s21, 0
      %p62 = por %p60, %p61
      %s63 = ssub.s32 %s22, %s34
      %s64 = ssub.s32 %s23, %s30
      %s65 = sor.u32 %s63, %s64
      %p66 = scmp.eq.s32.totalorder %s65, 0
      %s68 = sadd.s32 %s67, 1
      %s69 = scalar_select %p66, %s67, %s68
      %p72 = pneg %p66
      %p73 = scmp.eq.s32.totalorder %s15, 1
      %p74 = por %p72, %p73
      %p75 = scmp.ne.s32.totalorder %s67, %s70
      %p76 = scmp.eq.s32.totalorder %s15, 0
      %p77 = por %p75, %p76
      %p78 = scmp.ne.s32.totalorder %s67, %s70
      %p79 = scmp.eq.s32.totalorder %s20, 1
      %p80 = por %p78, %p79
      %p81 = scmp.ne.s32.totalorder %s70, %s71
      %p82 = scmp.eq.s32.totalorder %s20, 0
      %p83 = por %p81, %p82
      %p84 = scmp.ne.s32.totalorder %s70, %s71
      %p85 = scmp.eq.s32.totalorder %s21, 1
      %p86 = por %p84, %p85
      %p88 = scmp.ne.s32.totalorder %s71, %s87
      %p89 = scmp.eq.s32.totalorder %s21, 0
      %p90 = por %p88, %p89
      %s91 = ssub.s32 %s22, %s34
      %s92 = ssub.s32 %s23, %s30
      %s93 = sor.u32 %s91, %s92
      %p94 = scmp.eq.s32.totalorder %s93, 0
      %s96 = sadd.s32 %s95, 1
      %s97 = scalar_select %p94, %s95, %s96
      %p100 = pneg %p94
      %p101 = scmp.eq.s32.totalorder %s15, 1
      %p102 = por %p100, %p101
      %p103 = scmp.ne.s32.totalorder %s95, %s98
      %p104 = scmp.eq.s32.totalorder %s15, 0
      %p105 = por %p103, %p104
      %p106 = scmp.ne.s32.totalorder %s95, %s98
      %p107 = scmp.eq.s32.totalorder %s20, 1
      %p108 = por %p106, %p107
      %p109 = scmp.ne.s32.totalorder %s98, %s99
      %p110 = scmp.eq.s32.totalorder %s20, 0
      %p111 = por %p109, %p110
      %p112 = scmp.ne.s32.totalorder %s98, %s99
      %p113 = scmp.eq.s32.totalorder %s21, 1
      %p114 = por %p112, %p113
      %p116 = scmp.ne.s32.totalorder %s99, %s115
      %p117 = scmp.eq.s32.totalorder %s21, 0
      %p118 = por %p116, %p117
      %s120 = sadd.s32 %s119, 1
      %p123 = scmp.eq.s32.totalorder %s15, 1
      %p124 = scmp.ne.s32.totalorder %s119, %s121
      %p125 = scmp.eq.s32.totalorder %s15, 0
      %p126 = por %p124, %p125
      %p127 = scmp.ne.s32.totalorder %s119, %s121
      %p128 = scmp.eq.s32.totalorder %s20, 1
      %p129 = por %p127, %p128
      %p130 = scmp.ne.s32.totalorder %s121, %s122
      %p131 = scmp.eq.s32.totalorder %s20, 0
      %p132 = por %p130, %p131
      %p133 = scmp.ne.s32.totalorder %s121, %s122
      %p134 = scmp.eq.s32.totalorder %s21, 1
      %p135 = por %p133, %p134
      %p137 = scmp.ne.s32.totalorder %s122, %s136
      %p138 = scmp.eq.s32.totalorder %s21, 0
      %p139 = por %p137, %p138
      %s141 = sadd.s32 %s140, 1
      %p144 = scmp.eq.s32.totalorder %s15, 1
      %p145 = scmp.ne.s32.totalorder %s140, %s142
      %p146 = scmp.eq.s32.totalorder %s15, 0
      %p147 = por %p145, %p146
      %p148 = scmp.ne.s32.totalorder %s140, %s142
      %p149 = scmp.eq.s32.totalorder %s20, 1
      %p150 = por %p148, %p149
      %p151 = scmp.ne.s32.totalorder %s142, %s143
      %p152 = scmp.eq.s32.totalorder %s20, 0
      %p153 = por %p151, %p152
      %p154 = scmp.ne.s32.totalorder %s142, %s143
      %p155 = scmp.eq.s32.totalorder %s21, 1
      %p156 = por %p154, %p155
      %p158 = scmp.ne.s32.totalorder %s143, %s157
      %p159 = scmp.eq.s32.totalorder %s21, 0
      %p160 = por %p158, %p159
      %s162 = sadd.s32 %s161, 1
      %p165 = scmp.eq.s32.totalorder %s15, 1
      %p166 = scmp.ne.s32.totalorder %s161, %s163
      %p167 = scmp.eq.s32.totalorder %s15, 0
      %p168 = por %p166, %p167
      %p169 = scmp.ne.s32.totalorder %s161, %s163
      %p170 = scmp.eq.s32.totalorder %s20, 1
      %p171 = por %p169, %p170
      %p172 = scmp.ne.s32.totalorder %s163, %s164
      %p173 = scmp.eq.s32.totalorder %s20, 0
      %p174 = por %p172, %p173
      %p175 = scmp.ne.s32.totalorder %s163, %s164
      %p176 = scmp.eq.s32.totalorder %s21, 1
      %p177 = por %p175, %p176
      %p179 = scmp.ne.s32.totalorder %s164, %s178
      %p180 = scmp.eq.s32.totalorder %s21, 0
      %p181 = por %p179, %p180
      %s182 = ssub.s32 %s22, %s34
      %s183 = ssub.s32 %s23, %s30
      %s184 = sor.u32 %s182, %s183
      %p185 = scmp.eq.s32.totalorder %s184, 0
      %s187 = sadd.s32 %s186, 1
      %s188 = scalar_select %p185, %s186, %s187
      %p191 = pneg %p185
      %p192 = scmp.eq.s32.totalorder %s15, 1
      %p193 = por %p191, %p192
      %p194 = scmp.ne.s32.totalorder %s186, %s189
      %p195 = scmp.eq.s32.totalorder %s15, 0
      %p196 = por %p194, %p195
      %p197 = scmp.ne.s32.totalorder %s186, %s189
      %p198 = scmp.eq.s32.totalorder %s20, 1
      %p199 = por %p197, %p198
      %p200 = scmp.ne.s32.totalorder %s189, %s190
      %p201 = scmp.eq.s32.totalorder %s20, 0
      %p202 = por %p200, %p201
      %p203 = scmp.ne.s32.totalorder %s189, %s190
      %p204 = scmp.eq.s32.totalorder %s21, 1
      %p205 = por %p203, %p204
      %p207 = scmp.ne.s32.totalorder %s190, %s206
      %p208 = scmp.eq.s32.totalorder %s21, 0
      %p209 = por %p207, %p208
      %p210 = scmp.le.s32.totalorder 1, %s15
      %p211 = scmp.lt.s32.totalorder %s15, 3
      %p212 = pnand %p210, %p211
      %p213 = pneg %p212
      // Predicated region
      $region9: #{tpu_custom_call.1} parent=5 // pred_check
        _
      $region10: #{tpu_custom_call.1} parent=5 // pred_check_branch
        %215 = sbr.rel (%p212) target = $region12
      $region11: #{tpu_custom_call.1} parent=5 // pred_region
        %s216 = ssub.s32 %s15, 1
        // Predicated region
        $region13: #{tpu_custom_call.1} parent=11 // pred_check
          %p217 = pneg %p132
        $region14: #{tpu_custom_call.1} parent=11 // pred_check_branch
          %219 = sbr.rel (%p217) target = $region16
        $region15: #{tpu_custom_call.1} parent=11 // pred_region
          _
        $region16: #{tpu_custom_call.1} parent=11 // pred_fallthru
          _
        // Predicated region
        $region17: #{tpu_custom_call.1} parent=11 // pred_check
          %p220 = pneg %p153
        $region18: #{tpu_custom_call.1} parent=11 // pred_check_branch
          %222 = sbr.rel (%p220) target = $region20
        $region19: #{tpu_custom_call.1} parent=11 // pred_region
          _
        $region20: #{tpu_custom_call.1} parent=11 // pred_fallthru
          _
        // Predicated region
        $region21: #{tpu_custom_call.1} parent=11 // pred_check
          %p223 = pneg %p174
        $region22: #{tpu_custom_call.1} parent=11 // pred_check_branch
          %225 = sbr.rel (%p223) target = $region24
        $region23: #{tpu_custom_call.1} parent=11 // pred_region
          _
        $region24: #{tpu_custom_call.1} parent=11 // pred_fallthru
          _
      $region12: #{tpu_custom_call.1} parent=5 // pred_fallthru
        _
      %p226 = scmp.lt.s32.totalorder %s15, 2
      // Predicated region
      $region25: #{tpu_custom_call.1} parent=5 // pred_check
        %p227 = pneg %p226
      $region26: #{tpu_custom_call.1} parent=5 // pred_check_branch
        %229 = sbr.rel (%p227) target = $region28
      $region27: #{tpu_custom_call.1} parent=5 // pred_region
        // Predicated region
        $region29: #{tpu_custom_call.1} parent=27 // pred_check
          %p230 = pneg %p49
        $region30: #{tpu_custom_call.1} parent=27 // pred_check_branch
          %232 = sbr.rel (%p230) target = $region32
        $region31: #{tpu_custom_call.1} parent=27 // pred_region
          %s233 = smul.u32 2, %s23
          %p234 = scmp.lt.s32.totalorder %s22, 1
          %s235 = scalar_select %p234, %s22, 1
          %p236 = scmp.lt.s32.totalorder %s233, 1
          %s237 = scalar_select %p236, %s233, 1
          %s238 = smul.addr %s235, 2
          %s239 = sadd.s32 %s237, %s238
          %s240 = smul.addr %s239, 4
          %s241 = scalar_lea.vmem %s0, %s240
          %s242 = smul.u32 2, %s23
        $region32: #{tpu_custom_call.1} parent=27 // pred_fallthru
          _
        // Predicated region
        $region33: #{tpu_custom_call.1} parent=27 // pred_check
          %p243 = pneg %p77
        $region34: #{tpu_custom_call.1} parent=27 // pred_check_branch
          %245 = sbr.rel (%p243) target = $region36
        $region35: #{tpu_custom_call.1} parent=27 // pred_region
          %p246 = scmp.lt.s32.totalorder %s22, 1
          %s247 = scalar_select %p246, %s22, 1
          %p248 = scmp.lt.s32.totalorder %s23, 0
          %s249 = scalar_select %p248, %s23, 0
          %s250 = sadd.s32 %s249, %s247
          %s251 = scalar_lea.vmem %s1, %s250
        $region36: #{tpu_custom_call.1} parent=27 // pred_fallthru
          _
        // Predicated region
        $region37: #{tpu_custom_call.1} parent=27 // pred_check
          %p252 = pneg %p105
        $region38: #{tpu_custom_call.1} parent=27 // pred_check_branch
          %254 = sbr.rel (%p252) target = $region40
        $region39: #{tpu_custom_call.1} parent=27 // pred_region
          %p255 = scmp.lt.s32.totalorder %s22, 1
          %s256 = scalar_select %p255, %s22, 1
          %p257 = scmp.lt.s32.totalorder %s23, 0
          %s258 = scalar_select %p257, %s23, 0
          %s259 = sadd.s32 %s258, %s256
          %s260 = scalar_lea.vmem %s2, %s259
        $region40: #{tpu_custom_call.1} parent=27 // pred_fallthru
          _
      $region28: #{tpu_custom_call.1} parent=5 // pred_fallthru
        _
      %p261 = scmp.le.s32.totalorder 1, %s15
      %p262 = scmp.lt.s32.totalorder %s15, 3
      %p263 = pnand %p261, %p262
      %p264 = pneg %p263
      // Predicated region
      $region41: #{tpu_custom_call.1} parent=5 // pred_check
        _
      $region42: #{tpu_custom_call.1} parent=5 // pred_check_branch
        %266 = sbr.rel (%p263) target = $region44
      $region43: #{tpu_custom_call.1} parent=5 // pred_region
        %s267 = ssub.s32 %s15, 1
        %s268 = smul.u32 2, %s25
        %p269 = scmp.lt.s32.totalorder %s24, 1
        %s270 = scalar_select %p269, %s24, 1
        %p271 = scmp.lt.s32.totalorder %s268, 1
        %s272 = scalar_select %p271, %s268, 1
        %s273 = smul.addr %s270, 2
        %s274 = sadd.s32 %s272, %s273
        %s275 = smul.addr %s274, 4
        %s276 = scalar_lea.vmem %s0, %s275
        %p277 = pneg %p55
        %p278 = pneg %p52
        %p279 = scmp.lt.s32.totalorder %s24, 1
        %s280 = scalar_select %p279, %s24, 1
        %p281 = scmp.lt.s32.totalorder %s25, 0
        %s282 = scalar_select %p281, %s25, 0
        %s283 = sadd.s32 %s282, %s280
        %s284 = scalar_lea.vmem %s1, %s283
        %p285 = pneg %p83
        %p286 = pneg %p80
        %p287 = scmp.lt.s32.totalorder %s24, 1
        %s288 = scalar_select %p287, %s24, 1
        %p289 = scmp.lt.s32.totalorder %s25, 0
        %s290 = scalar_select %p289, %s25, 0
        %s291 = sadd.s32 %s290, %s288
        %s292 = scalar_lea.vmem %s2, %s291
        %p293 = pneg %p111
        %p294 = pneg %p108
        %p295 = pneg %p132
        %p296 = pneg %p129
        %p297 = pneg %p153
        %p298 = pneg %p150
        %p299 = pneg %p174
        %p300 = pneg %p171
        %p301 = pneg %p202
        %p302 = pneg %p199
        %s303 = sand.u32 %s189, 1
        %s304 = scalar_lea.sflag [#allocation3], %s303
        %s305 = sand.u32 %s189, 1
        %s306 = smul.addr %s305, 16
        %s307 = scalar_lea.vmem [#allocation2], %s306
        %s308 = smul.u32 2, %s25
        %p309 = scmp.lt.s32.totalorder %s24, 1
        %s310 = scalar_select %p309, %s24, 1
        %p311 = scmp.lt.s32.totalorder %s308, 1
        %s312 = scalar_select %p311, %s308, 1
        %s313 = smul.addr %s310, 2
        %s314 = sadd.s32 %s312, %s313
        %s315 = smul.addr %s314, 4
        %s316 = scalar_lea.vmem %s0, %s315
        %s317 = smul.u32 2, %s25
        %p318 = scmp.lt.s32.totalorder %s24, 1
        %s319 = scalar_select %p318, %s24, 1
        %p320 = scmp.lt.s32.totalorder %s25, 0
        %s321 = scalar_select %p320, %s25, 0
        %s322 = sadd.s32 %s321, %s319
        %s323 = scalar_lea.vmem %s1, %s322
        %p324 = scmp.lt.s32.totalorder %s24, 1
        %s325 = scalar_select %p324, %s24, 1
        %p326 = scmp.lt.s32.totalorder %s25, 0
        %s327 = scalar_select %p326, %s25, 0
        %s328 = sadd.s32 %s327, %s325
        %s329 = scalar_lea.vmem %s2, %s328
        %s330 = smul.u32 2, %s25
        %v332 = vld [vmem:[%s316] sm:$0xf]
        %v333 = vld [vmem:[%s316 + $0x4] sm:$0xf]
        %v334 = vld [vmem:[%s3] sm:$0xf]
        %v335 = vld [vmem:[%s4] sm:$0xf]
        %v338 = vunpack.c.l.b16 %v332
        %v339 = vunpack.c.l.b16 %v333
        %v340 = vpack.c.b16 %v339, %v338
        %vm341 = vcmask 64512
        %v343 = vsel %vm341, %v340, 0
        %vm345 = vcmask 1043456
        %v347 = vsel %vm345, %v335, 0
        %349 = vmatprep.subr.bf16.mxu0 0
        %350 = vmatpush1.bf16.msra.mxu0 %v347
        %351 = vmatprep.subr.bf16.mxu0 0
        %352 = vmatpush1.bf16.msra.mxu0 0
        %353 = vmatprep.subr.bf16.mxu0 0
        %354 = vmatpush1.bf16.msra.mxu0 0
        %355 = vmatprep.subr.bf16.mxu0 0
        %356 = vmatpush1.bf16.msra.mxu0 0
        %357 = vmatprep.subr.bf16.mxu0 0
        %358 = vmatpush1.bf16.msra.mxu0 0
        %359 = vmatprep.subr.bf16.mxu0 0
        %360 = vmatpush1.bf16.msra.mxu0 0
        %361 = vmatprep.subr.bf16.mxu0 0
        %362 = vmatpush1.bf16.msra.mxu0 0
        %363 = vmatprep.subr.bf16.mxu0 0
        %364 = vmatpush1.bf16.msra.mxu0 0
        %365 = vmatprep.subr.bf16.mxu0 0
        %366 = vmatpush1.bf16.msra.mxu0 0
        %367 = vmatprep.subr.bf16.mxu0 0
        %368 = vmatpush1.bf16.msra.mxu0 0
        %369 = vmatprep.subr.bf16.mxu0 0
        %370 = vmatpush1.bf16.msra.mxu0 0
        %371 = vmatprep.subr.bf16.mxu0 0
        %372 = vmatpush1.bf16.msra.mxu0 0
        %373 = vmatprep.subr.bf16.mxu0 0
        %374 = vmatpush1.bf16.msra.mxu0 0
        %375 = vmatprep.subr.bf16.mxu0 0
        %376 = vmatpush1.bf16.msra.mxu0 0
        %377 = vmatprep.subr.bf16.mxu0 0
        %378 = vmatpush1.bf16.msra.mxu0 0
        %379 = vmatprep.subr.bf16.mxu0 0
        %380 = vmatpush1.bf16.msra.mxu0 0
        %381 = vmatprep.mubr.bf16.mxu0 0
        %382 = vmatmul.mubr.bf16.gmra.mrb[0].mxu0 %v343
        %v383 = vpop.f32.mrb[0].mxu0
        %v384 = vadd.f32 0.0, %v383
        %v385 = vpop.f32.mrb[0].mxu0
        %v386 = vpop.f32.mrb[0].mxu0
        %v387 = vadd.f32 0.0, %v386
        %v388 = vpop.f32.mrb[0].mxu0
        %389 = vdwg.mxu0
        %s390 = scalar_lea.vmem %s4, 4
        %v391 = vld [vmem:[%s390] sm:$0xf]
        %v393 = vsel %vm345, %v391, 0
        %395 = vmatprep.subr.bf16.mxu0 0
        %396 = vmatpush1.bf16.msra.mxu0 %v393
        %397 = vmatprep.subr.bf16.mxu0 0
        %398 = vmatpush1.bf16.msra.mxu0 0
        %399 = vmatprep.subr.bf16.mxu0 0
        %400 = vmatpush1.bf16.msra.mxu0 0
        %401 = vmatprep.subr.bf16.mxu0 0
        %402 = vmatpush1.bf16.msra.mxu0 0
        %403 = vmatprep.subr.bf16.mxu0 0
        %404 = vmatpush1.bf16.msra.mxu0 0
        %405 = vmatprep.subr.bf16.mxu0 0
        %406 = vmatpush1.bf16.msra.mxu0 0
        %407 = vmatprep.subr.bf16.mxu0 0
        %408 = vmatpush1.bf16.msra.mxu0 0
        %409 = vmatprep.subr.bf16.mxu0 0
        %410 = vmatpush1.bf16.msra.mxu0 0
        %411 = vmatprep.subr.bf16.mxu0 0
        %412 = vmatpush1.bf16.msra.mxu0 0
        %413 = vmatprep.subr.bf16.mxu0 0
        %414 = vmatpush1.bf16.msra.mxu0 0
        %415 = vmatprep.subr.bf16.mxu0 0
        %416 = vmatpush1.bf16.msra.mxu0 0
        %417 = vmatprep.subr.bf16.mxu0 0
        %418 = vmatpush1.bf16.msra.mxu0 0
        %419 = vmatprep.subr.bf16.mxu0 0
        %420 = vmatpush1.bf16.msra.mxu0 0
        %421 = vmatprep.subr.bf16.mxu0 0
        %422 = vmatpush1.bf16.msra.mxu0 0
        %423 = vmatprep.subr.bf16.mxu0 0
        %424 = vmatpush1.bf16.msra.mxu0 0
        %425 = vmatprep.subr.bf16.mxu0 0
        %426 = vmatpush1.bf16.msra.mxu0 0
        %427 = vmatprep.mubr.bf16.mxu0 0
        %428 = vmatmul.mubr.bf16.gmra.mrb[0].mxu0 %v343
        %v429 = vpop.f32.mrb[0].mxu0
        %v430 = vadd.f32 0.0, %v429
        %v431 = vpop.f32.mrb[0].mxu0
        %v432 = vpop.f32.mrb[0].mxu0
        %v433 = vadd.f32 0.0, %v432
        %v434 = vpop.f32.mrb[0].mxu0
        %435 = vdwg.mxu0
        %v436 = vld [vmem:[%s323] sm:$0x1]
        %v438 = vsel %vm341, %v436, 0
        %440 = vmatprep.subr.bf16.mxu0 0
        %441 = vmatpush1.bf16.msra.mxu0 %v347
        %442 = vmatprep.subr.bf16.mxu0 0
        %443 = vmatpush1.bf16.msra.mxu0 0
        %444 = vmatprep.subr.bf16.mxu0 0
        %445 = vmatpush1.bf16.msra.mxu0 0
        %446 = vmatprep.subr.bf16.mxu0 0
        %447 = vmatpush1.bf16.msra.mxu0 0
        %448 = vmatprep.subr.bf16.mxu0 0
        %449 = vmatpush1.bf16.msra.mxu0 0
        %450 = vmatprep.subr.bf16.mxu0 0
        %451 = vmatpush1.bf16.msra.mxu0 0
        %452 = vmatprep.subr.bf16.mxu0 0
        %453 = vmatpush1.bf16.msra.mxu0 0
        %454 = vmatprep.subr.bf16.mxu0 0
        %455 = vmatpush1.bf16.msra.mxu0 0
        %456 = vmatprep.subr.bf16.mxu0 0
        %457 = vmatpush1.bf16.msra.mxu0 0
        %458 = vmatprep.subr.bf16.mxu0 0
        %459 = vmatpush1.bf16.msra.mxu0 0
        %460 = vmatprep.subr.bf16.mxu0 0
        %461 = vmatpush1.bf16.msra.mxu0 0
        %462 = vmatprep.subr.bf16.mxu0 0
        %463 = vmatpush1.bf16.msra.mxu0 0
        %464 = vmatprep.subr.bf16.mxu0 0
        %465 = vmatpush1.bf16.msra.mxu0 0
        %466 = vmatprep.subr.bf16.mxu0 0
        %467 = vmatpush1.bf16.msra.mxu0 0
        %468 = vmatprep.subr.bf16.mxu0 0
        %469 = vmatpush1.bf16.msra.mxu0 0
        %470 = vmatprep.subr.bf16.mxu0 0
        %471 = vmatpush1.bf16.msra.mxu0 0
        %472 = vmatprep.mubr.bf16.mxu0 0
        %473 = vmatmul.mubr.bf16.gmra.mrb[0].mxu0 %v438
        %v474 = vpop.f32.mrb[0].mxu0
        %v475 = vadd.f32 0.0, %v474
        %v476 = vpop.f32.mrb[0].mxu0
        %v477 = vpop.f32.mrb[0].mxu0
        %v478 = vpop.f32.mrb[0].mxu0
        %479 = vdwg.mxu0
        %v480 = vld [vmem:[%s329] sm:$0x1]
        %v482 = vsel %vm341, %v480, 0
        %484 = vmatprep.subr.bf16.mxu0 0
        %485 = vmatpush1.bf16.msra.mxu0 %v393
        %486 = vmatprep.subr.bf16.mxu0 0
        %487 = vmatpush1.bf16.msra.mxu0 0
        %488 = vmatprep.subr.bf16.mxu0 0
        %489 = vmatpush1.bf16.msra.mxu0 0
        %490 = vmatprep.subr.bf16.mxu0 0
        %491 = vmatpush1.bf16.msra.mxu0 0
        %492 = vmatprep.subr.bf16.mxu0 0
        %493 = vmatpush1.bf16.msra.mxu0 0
        %494 = vmatprep.subr.bf16.mxu0 0
        %495 = vmatpush1.bf16.msra.mxu0 0
        %496 = vmatprep.subr.bf16.mxu0 0
        %497 = vmatpush1.bf16.msra.mxu0 0
        %498 = vmatprep.subr.bf16.mxu0 0
        %499 = vmatpush1.bf16.msra.mxu0 0
        %500 = vmatprep.subr.bf16.mxu0 0
        %501 = vmatpush1.bf16.msra.mxu0 0
        %502 = vmatprep.subr.bf16.mxu0 0
        %503 = vmatpush1.bf16.msra.mxu0 0
        %504 = vmatprep.subr.bf16.mxu0 0
        %505 = vmatpush1.bf16.msra.mxu0 0
        %506 = vmatprep.subr.bf16.mxu0 0
        %507 = vmatpush1.bf16.msra.mxu0 0
        %508 = vmatprep.subr.bf16.mxu0 0
        %509 = vmatpush1.bf16.msra.mxu0 0
        %510 = vmatprep.subr.bf16.mxu0 0
        %511 = vmatpush1.bf16.msra.mxu0 0
        %512 = vmatprep.subr.bf16.mxu0 0
        %513 = vmatpush1.bf16.msra.mxu0 0
        %514 = vmatprep.subr.bf16.mxu0 0
        %515 = vmatpush1.bf16.msra.mxu0 0
        %516 = vmatprep.mubr.bf16.mxu0 0
        %517 = vmatmul.mubr.bf16.gmra.mrb[0].mxu0 %v482
        %v518 = vpop.f32.mrb[0].mxu0
        %v519 = vadd.f32 0.0, %v518
        %v520 = vpop.f32.mrb[0].mxu0
        %v521 = vpop.f32.mrb[0].mxu0
        %v522 = vpop.f32.mrb[0].mxu0
        %523 = vdwg.mxu0
        %v524 = vlaneseq
        %v525 = vshrl.u32 %v524, 7
        %v526 = vadd.s32 %v525, 8
        %vm527 = vcmp.eq.s32.totalorder %v525, 0
        %vm528 = vcmp.eq.s32.totalorder %v526, 0
        %v529 = vrot.slane %v384, 7
        %v530 = vrot.slane %v387, 7
        %vm531 = vcmp.lt.s32.totalorder %v525, 1
        %v532 = vsel %vm531, %v529, %v530
        %v533 = vsel %vm531, %v530, %v529
        %v534 = vlaneseq
        %v535 = vshrl.u32 %v534, 7
        %v536 = vsub.s32 0, %v535
        %v537 = vrot.slane %v475, %v536
        %v538 = vsel %vm527, %v537, %v533
        %v539 = vsel %vm528, %v537, %v532
        %vm540 = vcmp.eq.s32.totalorder %v525, 15
        %vm541 = vcmp.eq.s32.totalorder %v526, 15
        %v542 = vrot.slane %v430, 1
        %v543 = vrot.slane %v433, 1
        %vm544 = vcmp.lt.s32.totalorder %v525, 7
        %v545 = vsel %vm544, %v542, %v543
        %v546 = vsel %vm544, %v543, %v542
        %v547 = vlaneseq
        %v548 = vshrl.u32 %v547, 7
        %v549 = vsub.s32 0, %v548
        %v550 = vrot.slane %v519, %v549
        %v551 = vsel %vm540, %v550, %v545
        %v552 = vsel %vm541, %v550, %v546
        %555 = vrot.lane.b32.xlu0 %v551, 8
        %v556 = vpop.permute.xlu0 %555
        %557 = vrot.lane.b32.xlu0 %v552, 8
        %v558 = vpop.permute.xlu0 %557
        %v561 = vsel %vm341, %v538, %v556
        %v562 = vsel %vm341, %v539, %v558
        %v564 = vsel %vm345, %v334, 0
        %566 = vmatprep.subr.bf16.mxu0 0
        %567 = vmatpush1.bf16.msra.mxu0 %v564
        %568 = vmatprep.subr.bf16.mxu0 0
        %569 = vmatpush1.bf16.msra.mxu0 0
        %570 = vmatprep.subr.bf16.mxu0 0
        %571 = vmatpush1.bf16.msra.mxu0 0
        %572 = vmatprep.subr.bf16.mxu0 0
        %573 = vmatpush1.bf16.msra.mxu0 0
        %574 = vmatprep.subr.bf16.mxu0 0
        %575 = vmatpush1.bf16.msra.mxu0 0
        %576 = vmatprep.subr.bf16.mxu0 0
        %577 = vmatpush1.bf16.msra.mxu0 0
        %578 = vmatprep.subr.bf16.mxu0 0
        %579 = vmatpush1.bf16.msra.mxu0 0
        %580 = vmatprep.subr.bf16.mxu0 0
        %581 = vmatpush1.bf16.msra.mxu0 0
        %582 = vmatprep.subr.bf16.mxu0 0
        %583 = vmatpush1.bf16.msra.mxu0 0
        %584 = vmatprep.subr.bf16.mxu0 0
        %585 = vmatpush1.bf16.msra.mxu0 0
        %586 = vmatprep.subr.bf16.mxu0 0
        %587 = vmatpush1.bf16.msra.mxu0 0
        %588 = vmatprep.subr.bf16.mxu0 0
        %589 = vmatpush1.bf16.msra.mxu0 0
        %590 = vmatprep.subr.bf16.mxu0 0
        %591 = vmatpush1.bf16.msra.mxu0 0
        %592 = vmatprep.subr.bf16.mxu0 0
        %593 = vmatpush1.bf16.msra.mxu0 0
        %594 = vmatprep.subr.bf16.mxu0 0
        %595 = vmatpush1.bf16.msra.mxu0 0
        %596 = vmatprep.subr.bf16.mxu0 0
        %597 = vmatpush1.bf16.msra.mxu0 0
        %598 = vmatprep.mubr.bf16.mxu0 0
        %599 = vmatmul.mubr.bf16.gmra.mrb[0].mxu0 %v343
        %v600 = vpop.f32.mrb[0].mxu0
        %v601 = vadd.f32 %v561, %v600
        %v602 = vpop.f32.mrb[0].mxu0
        %v603 = vpop.f32.mrb[0].mxu0
        %v604 = vadd.f32 %v562, %v603
        %v605 = vpop.f32.mrb[0].mxu0
        %606 = vdwg.mxu0
        %v607 = vld [vmem:[%s5] sm:$0x1]
        %v609 = vlaneseq
        %v610 = vshrl.u32 %v609, 7
        %v611 = vsub.s32 0, %v610
        %v612 = vrot.slane %v607, %v611
        %v614 = vadd.f32 %v601, %v612
        %v615 = vadd.f32 %v604, %v612
        %vm616 = vcmask 130048
        %617 = vst.msk [vmem:[%s307] sm:$0xff] %vm616, %v614
        %618 = vst.msk [vmem:[%s307 + $0x8] sm:$0xff] %vm616, %v615
        %s619 = sand.u32 %s189, 1
        %s620 = scalar_lea.sflag [#allocation3], %s619
        %s621 = sand.u32 %s189, 1
        %s622 = smul.addr %s621, 16
        %s623 = scalar_lea.vmem [#allocation2], %s622
        // Predicated region
        $region45: #{tpu_custom_call.1} parent=43 // pred_check
          %p624 = pneg %p199
        $region46: #{tpu_custom_call.1} parent=43 // pred_check_branch
          %626 = sbr.rel (%p624) target = $region48
        $region47: #{tpu_custom_call.1} parent=43 // pred_region
          %s627 = smul.u32 2, %s25
          %s629 = ssub.s32 256, 256
          %630 = vsyncadd %s620, %s629
          %s631 = smul.addr %s24, 2
          %s632 = sadd.s32 %s627, %s631
          %s633 = smul.addr %s632, 128
          %s634 = scalar_lea.hbm %s6, %s633
          %s635 = sshll.u32 %s623, 4
          %s636 = int_to_ptr.vmem [resolvable:$true] %s635
          %641 = dma.vmem_to_hbm [thread:$0]  %s636, 256, %s634, %s620, 128, 128, 8
        $region48: #{tpu_custom_call.1} parent=43 // pred_fallthru
          _
      $region44: #{tpu_custom_call.1} parent=5 // pred_fallthru
        _
      %p642 = scmp.le.s32.totalorder 2, %s15
      // Predicated region
      $region49: #{tpu_custom_call.1} parent=5 // pred_check
        %p643 = pneg %p642
      $region50: #{tpu_custom_call.1} parent=5 // pred_check_branch
        %645 = sbr.rel (%p643) target = $region52
      $region51: #{tpu_custom_call.1} parent=5 // pred_region
        %s646 = ssub.s32 %s15, 2
        // Predicated region
        $region53: #{tpu_custom_call.1} parent=51 // pred_check
          %p647 = pneg %p205
        $region54: #{tpu_custom_call.1} parent=51 // pred_check_branch
          %649 = sbr.rel (%p647) target = $region56
        $region55: #{tpu_custom_call.1} parent=51 // pred_region
          %s650 = sand.u32 %s190, 1
          %s651 = scalar_lea.sflag [#allocation3], %s650
          %s652 = sand.u32 %s190, 1
          %s653 = smul.addr %s652, 16
          %s654 = scalar_lea.vmem [#allocation2], %s653
          %655 = dma.done %s651, 256
        $region56: #{tpu_custom_call.1} parent=51 // pred_fallthru
          _
      $region52: #{tpu_custom_call.1} parent=5 // pred_fallthru
        _
    $region6: #{tpu_custom_call.1} parent=1 // loop_footer
      %s19 = sadd.s32 1, %s15
    $region7: #{tpu_custom_call.1} parent=1 // loop_footer_branch
      %14 = sbr.rel target = $region3
    $region8: #{tpu_custom_call.1} parent=1 // loop_exit
      _
    %656 = vsyncpa [#allocation3], 1
    %s657 = scalar_lea.sflag [#allocation3], 1
    %658 = vsyncpa %s657, 1

</llo_original>
